<compile_context>
chip_gen: v7x
topology: tpu7x:2x2x1
jax: 0.10.0
libtpu: 0.0.40
codegen_flags: <defaults>
</compile_context>

<pallas_src>
import functools

import jax
import jax.numpy as jnp
from jax.experimental import pallas as pl
from jax.experimental.pallas import tpu as pltpu

_LANES = 128


def _soft_f1_kernel(x_ref, t_ref, out_ref, num_acc, den_acc, *,
                    n_valid, block_rows, steps, need_mask):
    k = pl.program_id(1)

    # Zero the lane-resident accumulators at the start of each chunk.
    @pl.when(k == 0)
    def _init():
        num_acc[...] = jnp.zeros_like(num_acc)
        den_acc[...] = jnp.zeros_like(den_acc)

    x = x_ref[...].astype(jnp.float32)
    t = t_ref[...].astype(jnp.float32)
    probs = jax.nn.sigmoid(x)                       # EUP transcendentals

    if need_mask:
        # Mask out the ragged tail / boundary-block garbage / duplicated
        # (clamped) trailing steps.  n_valid is static.
        # Note: int32 flat indexing limits n to < 2**31 elements.
        blk = pl.program_id(0) * steps + k
        base = blk * (block_rows * _LANES)
        row_ids = jax.lax.broadcasted_iota(jnp.int32, x.shape, 0)
        lane_ids = jax.lax.broadcasted_iota(jnp.int32, x.shape, 1)
        idx = base + row_ids * _LANES + lane_ids
        valid = idx < n_valid
        probs = jnp.where(valid, probs, 0.0)
        t = jnp.where(valid, t, 0.0)

    # Pure VPU elementwise accumulation in the hot loop (no per-step
    # cross-lane reduce, no SMEM scalar dependency chain).
    num_acc[...] += probs * t          # -> sum(p * t)      == tp
    den_acc[...] += probs + t          # -> sum(p) + sum(t) == 2tp + fp + fn

    # Flush lane partials once per chunk.
    @pl.when(k == pl.num_programs(1) - 1)
    def _flush():
        out_ref[0, 0:1, :] = jnp.sum(num_acc[...], axis=0, keepdims=True)
        out_ref[0, 1:2, :] = jnp.sum(den_acc[...], axis=0, keepdims=True)


def soft_f1_loss_pallas(logits, targets, epsilon=1e-7, *,
                        block_rows=2048, num_chunks=8):
    """1 - softF1 over all elements of `logits`/`targets` (any shape/dtype)."""
    n = logits.size
    flat_l = logits.reshape(-1)
    flat_t = targets.reshape(-1)

    rows = pl.cdiv(n, _LANES)
    padded_n = rows * _LANES
    if padded_n != n:
        # Tail pad only (values are masked out in-kernel).
        flat_l = jnp.pad(flat_l, (0, padded_n - n))
        flat_t = jnp.pad(flat_t, (0, padded_n - n))

    x2d = flat_l.reshape(rows, _LANES)
    t2d = flat_t.reshape(rows, _LANES)

    if rows <= block_rows:
        # Single block covering the whole array (block == full dims is legal
        # even when rows % 8 != 0).
        block_rows_eff = rows
        num_blocks = 1
    else:
        block_rows_eff = block_rows          # multiple of 8
        num_blocks = pl.cdiv(rows, block_rows_eff)

    num_chunks_eff = min(num_chunks, num_blocks)
    steps = pl.cdiv(num_blocks, num_chunks_eff)
    total_cover = num_chunks_eff * steps * block_rows_eff * _LANES
    need_mask = total_cover != n

    if num_chunks_eff * steps == num_blocks:
        def in_map(p, k):
            return (p * steps + k, 0)
    else:
        # Clamp the few duplicated trailing steps onto the last real block;
        # their contributions are fully masked out in-kernel.
        def in_map(p, k):
            return (jnp.minimum(p * steps + k, num_blocks - 1), 0)

    kernel = functools.partial(
        _soft_f1_kernel,
        n_valid=n,
        block_rows=block_rows_eff,
        steps=steps,
        need_mask=need_mask,
    )

    bytes_accessed = int(n * (x2d.dtype.itemsize + t2d.dtype.itemsize)
                         + num_chunks_eff * 2 * _LANES * 4)

    partials = pl.pallas_call(
        kernel,
        out_shape=jax.ShapeDtypeStruct((num_chunks_eff, 2, _LANES),
                                       jnp.float32),
        grid_spec=pltpu.PrefetchScalarGridSpec(
            num_scalar_prefetch=0,
            grid=(num_chunks_eff, steps),
            in_specs=[
                pl.BlockSpec((block_rows_eff, _LANES), in_map),
                pl.BlockSpec((block_rows_eff, _LANES), in_map),
            ],
            out_specs=pl.BlockSpec((1, 2, _LANES), lambda p, k: (p, 0, 0)),
            scratch_shapes=[
                pltpu.VMEM((block_rows_eff, _LANES), jnp.float32),
                pltpu.VMEM((block_rows_eff, _LANES), jnp.float32),
            ],
        ),
        compiler_params=pltpu.CompilerParams(
            dimension_semantics=("parallel", "arbitrary")),
        cost_estimate=pl.CostEstimate(
            flops=int(5 * n),
            transcendentals=int(n),
            bytes_accessed=bytes_accessed),
    )(x2d, t2d)

    # Tiny final combine (num_chunks_eff * 256 floats) in plain JAX.
    sums = jnp.sum(partials, axis=(0, 2))
    eps = jnp.float32(epsilon)
    soft_f1 = (2.0 * sums[0] + eps) / (sums[1] + eps)
    return 1.0 - soft_f1


def soft_f1_loss_ref(logits, targets, epsilon=1e-7):
    probs = jax.nn.sigmoid(logits.astype(jnp.float32))
    t = targets.astype(jnp.float32)
    tp = jnp.sum(probs * t)
    fp = jnp.sum(probs * (1.0 - t))
    fn = jnp.sum((1.0 - probs) * t)
    soft_f1 = (2.0 * tp + epsilon) / (2.0 * tp + fp + fn + epsilon)
    return 1.0 - soft_f1


if __name__ == "__main__":
    key = jax.random.PRNGKey(0)
    k_logits, k_targets = jax.random.split(key)

    # Segmentation-style binary loss inputs (NCHW).
    x = jax.random.normal(k_logits, (2, 4, 16, 16), dtype=jnp.float32)
    y = (jax.random.uniform(k_targets, (2, 4, 16, 16)) > 0.5).astype(jnp.float32)

    loss = jax.block_until_ready(soft_f1_loss_pallas(x, y))
    ref = soft_f1_loss_ref(x, y)
    assert jnp.allclose(loss, ref, rtol=1e-5, atol=1e-6), (loss, ref)

    # Ragged tail (n % 128 != 0) exercises the in-kernel mask path.
    x2 = jax.random.normal(k_logits, (3, 5, 17, 13), dtype=jnp.float32)
    y2 = (jax.random.uniform(k_targets, (3, 5, 17, 13)) > 0.5).astype(jnp.float32)
    loss2 = jax.block_until_ready(soft_f1_loss_pallas(x2, y2))
    ref2 = soft_f1_loss_ref(x2, y2)
    assert jnp.allclose(loss2, ref2, rtol=1e-5, atol=1e-6), (loss2, ref2)

    # Multi-chunk / multi-step / partial-last-block path, with a small tile
    # so the test input stays small.
    x3 = jax.random.normal(k_logits, (2, 4, 32, 100), dtype=jnp.float32)
    y3 = (jax.random.uniform(k_targets, (2, 4, 32, 100)) > 0.5).astype(jnp.float32)
    loss3 = jax.block_until_ready(
        soft_f1_loss_pallas(x3, y3, block_rows=64, num_chunks=3))
    ref3 = soft_f1_loss_ref(x3, y3)
    assert jnp.allclose(loss3, ref3, rtol=1e-5, atol=1e-6), (loss3, ref3)

    print("KERNEL_OK")
</pallas_src>

<mosaic_0001>
module attributes {stable_mosaic.version = 11 : i64} {
  func.func @_soft_f1_kernel(%arg0: i32, %arg1: i32, %arg2: memref<16x128xf32, #tpu.memory_space<vmem>>, %arg3: memref<16x128xf32, #tpu.memory_space<vmem>>, %arg4: memref<1x2x128xf32, #tpu.memory_space<vmem>>, %arg5: memref<16x128xf32, #tpu.memory_space<vmem>>, %arg6: memref<16x128xf32, #tpu.memory_space<vmem>>) attributes {dimension_semantics = [#tpu.dimension_semantics<parallel>, #tpu.dimension_semantics<arbitrary>], iteration_bounds = array<i64: 1, 1>, scalar_prefetch = 0 : i64, scratch_operands = 2 : i64, tpu.core_type = #tpu.core_type<tc>, window_params = [{transform_indices = @transform_0, window_bounds = array<i64: 16, 128>}, {transform_indices = @transform_1, window_bounds = array<i64: 16, 128>}, {transform_indices = @transform_2, window_bounds = array<i64: 1, 2, 128>}]} {
    %c0_i32 = arith.constant 0 : i32
    %0 = arith.cmpi eq, %arg1, %c0_i32 : i32
    %1 = arith.extui %0 : i1 to i32
    %c0_i32_0 = arith.constant 0 : i32
    %2 = arith.cmpi ne, %1, %c0_i32_0 : i32
    scf.if %2 {
      %cst_14 = arith.constant 0.000000e+00 : f32
      %21 = vector.broadcast %cst_14 : f32 to vector<16x128xf32>
      %c0_15 = arith.constant 0 : index
      %c0_16 = arith.constant 0 : index
      %22 = vector.load %arg5[%c0_15, %c0_16] : memref<16x128xf32, #tpu.memory_space<vmem>>, vector<16x128xf32>
      tpu.vector_store %arg5[%c0_15, %c0_16], %21 {strides = array<i32>} : memref<16x128xf32, #tpu.memory_space<vmem>>, vector<16x128xf32>,
      %cst_17 = arith.constant 0.000000e+00 : f32
      %23 = vector.broadcast %cst_17 : f32 to vector<16x128xf32>
      %c0_18 = arith.constant 0 : index
      %c0_19 = arith.constant 0 : index
      %24 = vector.load %arg6[%c0_18, %c0_19] : memref<16x128xf32, #tpu.memory_space<vmem>>, vector<16x128xf32>
      tpu.vector_store %arg6[%c0_18, %c0_19], %23 {strides = array<i32>} : memref<16x128xf32, #tpu.memory_space<vmem>>, vector<16x128xf32>,
    } else {
    }
    %c0 = arith.constant 0 : index
    %c0_1 = arith.constant 0 : index
    %3 = vector.load %arg2[%c0, %c0_1] : memref<16x128xf32, #tpu.memory_space<vmem>>, vector<16x128xf32>
    %c0_2 = arith.constant 0 : index
    %c0_3 = arith.constant 0 : index
    %4 = vector.load %arg3[%c0_2, %c0_3] : memref<16x128xf32, #tpu.memory_space<vmem>>, vector<16x128xf32>
    %5 = arith.negf %3 : vector<16x128xf32>
    %6 = math.exp %5 : vector<16x128xf32>
    %cst = arith.constant 1.000000e+00 : f32
    %7 = vector.broadcast %cst : f32 to vector<16x128xf32>
    %8 = arith.addf %7, %6 : vector<16x128xf32>
    %9 = arith.divf %7, %8 : vector<16x128xf32>
    %c0_4 = arith.constant 0 : index
    %c0_5 = arith.constant 0 : index
    %10 = vector.load %arg5[%c0_4, %c0_5] : memref<16x128xf32, #tpu.memory_space<vmem>>, vector<16x128xf32>
    %11 = arith.mulf %9, %4 : vector<16x128xf32>
    %12 = arith.addf %10, %11 : vector<16x128xf32>
    %c0_6 = arith.constant 0 : index
    %c0_7 = arith.constant 0 : index
    %13 = vector.load %arg5[%c0_6, %c0_7] : memref<16x128xf32, #tpu.memory_space<vmem>>, vector<16x128xf32>
    tpu.vector_store %arg5[%c0_6, %c0_7], %12 {strides = array<i32>} : memref<16x128xf32, #tpu.memory_space<vmem>>, vector<16x128xf32>,
    %c0_8 = arith.constant 0 : index
    %c0_9 = arith.constant 0 : index
    %14 = vector.load %arg6[%c0_8, %c0_9] : memref<16x128xf32, #tpu.memory_space<vmem>>, vector<16x128xf32>
    %15 = arith.addf %9, %4 : vector<16x128xf32>
    %16 = arith.addf %14, %15 : vector<16x128xf32>
    %c0_10 = arith.constant 0 : index
    %c0_11 = arith.constant 0 : index
    %17 = vector.load %arg6[%c0_10, %c0_11] : memref<16x128xf32, #tpu.memory_space<vmem>>, vector<16x128xf32>
    tpu.vector_store %arg6[%c0_10, %c0_11], %16 {strides = array<i32>} : memref<16x128xf32, #tpu.memory_space<vmem>>, vector<16x128xf32>,
    %c0_i32_12 = arith.constant 0 : i32
    %18 = arith.cmpi eq, %arg1, %c0_i32_12 : i32
    %19 = arith.extui %18 : i1 to i32
    %c0_i32_13 = arith.constant 0 : i32
    %20 = arith.cmpi ne, %19, %c0_i32_13 : i32
    scf.if %20 {
      %c0_14 = arith.constant 0 : index
      %c0_15 = arith.constant 0 : index
      %21 = vector.load %arg5[%c0_14, %c0_15] : memref<16x128xf32, #tpu.memory_space<vmem>>, vector<16x128xf32>
      %cst_16 = arith.constant dense<0.000000e+00> : vector<128xf32>
      %22 = vector.multi_reduction <add>, %21, %cst_16 [0] : vector<16x128xf32> to vector<128xf32>
      %23 = vector.shape_cast %22 : vector<128xf32> to vector<1x128xf32>
      %c0_17 = arith.constant 0 : index
      %c0_18 = arith.constant 0 : index
      %c0_19 = arith.constant 0 : index
      %24 = vector.load %arg4[%c0_17, %c0_18, %c0_19] : memref<1x2x128xf32, #tpu.memory_space<vmem>>, vector<1x1x128xf32>
      %25 = vector.shape_cast %24 : vector<1x1x128xf32> to vector<1x128xf32>
      %26 = vector.shape_cast %23 : vector<1x128xf32> to vector<1x1x128xf32>
      tpu.vector_store %arg4[%c0_17, %c0_18, %c0_19], %26 {strides = array<i32>} : memref<1x2x128xf32, #tpu.memory_space<vmem>>, vector<1x1x128xf32>,
      %c0_20 = arith.constant 0 : index
      %c0_21 = arith.constant 0 : index
      %27 = vector.load %arg6[%c0_20, %c0_21] : memref<16x128xf32, #tpu.memory_space<vmem>>, vector<16x128xf32>
      %cst_22 = arith.constant dense<0.000000e+00> : vector<128xf32>
      %28 = vector.multi_reduction <add>, %27, %cst_22 [0] : vector<16x128xf32> to vector<128xf32>
      %29 = vector.shape_cast %28 : vector<128xf32> to vector<1x128xf32>
      %c0_23 = arith.constant 0 : index
      %c1 = arith.constant 1 : index
      %c0_24 = arith.constant 0 : index
      %30 = vector.load %arg4[%c0_23, %c1, %c0_24] : memref<1x2x128xf32, #tpu.memory_space<vmem>>, vector<1x1x128xf32>
      %31 = vector.shape_cast %30 : vector<1x1x128xf32> to vector<1x128xf32>
      %32 = vector.shape_cast %29 : vector<1x128xf32> to vector<1x1x128xf32>
      tpu.vector_store %arg4[%c0_23, %c1, %c0_24], %32 {strides = array<i32>} : memref<1x2x128xf32, #tpu.memory_space<vmem>>, vector<1x1x128xf32>,
    } else {
    }
    return
  }
  func.func @transform_0(%arg0: i32, %arg1: i32) -> (i32, i32) {
    %c1_i32 = arith.constant 1 : i32
    %0 = arith.muli %arg0, %c1_i32 : i32
    %1 = arith.addi %0, %arg1 : i32
    %c0_i32 = arith.constant 0 : i32
    %c0_i32_0 = arith.constant 0 : i32
    return %1, %c0_i32 : i32, i32
  }
  func.func @transform_1(%arg0: i32, %arg1: i32) -> (i32, i32) {
    %c1_i32 = arith.constant 1 : i32
    %0 = arith.muli %arg0, %c1_i32 : i32
    %1 = arith.addi %0, %arg1 : i32
    %c0_i32 = arith.constant 0 : i32
    %c0_i32_0 = arith.constant 0 : i32
    return %1, %c0_i32 : i32, i32
  }
  func.func @transform_2(%arg0: i32, %arg1: i32) -> (i32, i32, i32) {
    %c0_i32 = arith.constant 0 : i32
    %c0_i32_0 = arith.constant 0 : i32
    %c0_i32_1 = arith.constant 0 : i32
    return %arg0, %c0_i32, %c0_i32_0 : i32, i32, i32
  }
}

</mosaic_0001>

<llo_original>
// kernel: tpu_custom_call.1
$region0: #{tpu_custom_call.1}
  #allocation0 [shape = 'u32[]', space=smem, size = 0x4, offset = 0x4, fixed_abs, tag = 'smem constant byte address 0x4 - core index']
  #allocation1 [shape = 'u32[144,128]{1,0:T(1,128)}', space=vmem, size = 0x12000, scoped, tag = 'internal scratch']
  #allocation2 [shape = 'f32[16,128]{1,0:T(8,128)}', space=vmem, size = 0x2000, scoped, tag = 'scratch operand']
  #allocation3 [shape = 'f32[16,128]{1,0:T(8,128)}', space=vmem, size = 0x2000, scoped, tag = 'scratch operand']
  %s0 = inlined_call_operand.hbm [shape: f32[16,128], index: 0, kind: input, shape index: {}]
  %s1 = inlined_call_operand.hbm [shape: f32[16,128], index: 1, kind: input, shape index: {}]
  %s2 = inlined_call_operand.hbm [shape: f32[1,2,128], index: 2, kind: output, shape index: {}]
  %s3 = sld [smem:[#allocation0]]
  $region34: #{tpu_custom_call.1} parent=0
    _
  %s5 = ssub.s32 1, %s3
  %s6 = scalar_select 0, %s5, %s3
  $region1: #{tpu_custom_call.1} parent=0
    #allocation4 [shape = 'u8[8192]{0}', space=vmem, size = 0x2000, scoped, tag = 'input window, operand 0, single buffered']
    #allocation5 [shape = 's32[1]{0}', space=sflag, size = 0x4, scoped, tag = 'scoped memory for tpu_custom_call.1']
    #allocation6 [shape = 's32[1]{0}', space=sflag, size = 0x4, scoped, tag = 'scoped memory for tpu_custom_call.1']
    #allocation7 [shape = 'u8[8192]{0}', space=vmem, size = 0x2000, scoped, tag = 'input window, operand 1, single buffered']
    #allocation8 [shape = 's32[1]{0}', space=sflag, size = 0x4, scoped, tag = 'scoped memory for tpu_custom_call.1']
    #allocation9 [shape = 'u8[1024]{0}', space=vmem, size = 0x400, scoped, tag = 'output window, operand 0, single buffered']
    %7 = vsyncpa [#allocation5], 0
    %8 = vsyncpa [#allocation8], 0
    %9 = vsyncpa [#allocation6], 0
    // Predicated region
    $region2: #{tpu_custom_call.1} parent=1 // pred_check
      _
    $region3: #{tpu_custom_call.1} parent=1 // pred_check_branch
      %11 = sbr.rel (0) target = $region5
    $region4: #{tpu_custom_call.1} parent=1 // pred_region
      %s12 = sadd.s32 0, 0
      %s13 = smul.u32 2, %s12
      %s15 = ssub.s32 256, 256
      %16 = vsyncadd [#allocation5], %s15
      %s17 = smul.addr %s13, 128
      %s18 = scalar_lea.hbm %s0, %s17
      %s19 = sshll.u32 [#allocation4], 4
      %s20 = int_to_ptr.vmem [resolvable:$true] %s19
      %25 = dma.hbm_to_vmem [thread:$0]  %s18, 256, %s20, [#allocation5], 128, 128, 8
    $region5: #{tpu_custom_call.1} parent=1 // pred_fallthru
      _
    // Predicated region
    $region6: #{tpu_custom_call.1} parent=1 // pred_check
      _
    $region7: #{tpu_custom_call.1} parent=1 // pred_check_branch
      %27 = sbr.rel (0) target = $region9
    $region8: #{tpu_custom_call.1} parent=1 // pred_region
      %s28 = sadd.s32 0, 0
      %s29 = smul.u32 2, %s28
      %s31 = ssub.s32 256, 256
      %32 = vsyncadd [#allocation8], %s31
      %s33 = smul.addr %s29, 128
      %s34 = scalar_lea.hbm %s1, %s33
      %s35 = sshll.u32 [#allocation7], 4
      %s36 = int_to_ptr.vmem [resolvable:$true] %s35
      %41 = dma.hbm_to_vmem [thread:$0]  %s34, 256, %s36, [#allocation8], 128, 128, 8
    $region9: #{tpu_custom_call.1} parent=1 // pred_fallthru
      _
    // Predicated region
    $region10: #{tpu_custom_call.1} parent=1 // pred_check
      _
    $region11: #{tpu_custom_call.1} parent=1 // pred_check_branch
      %43 = sbr.rel (0) target = $region13
    $region12: #{tpu_custom_call.1} parent=1 // pred_region
      %44 = dma.done [#allocation5], 256
    $region13: #{tpu_custom_call.1} parent=1 // pred_fallthru
      _
    // Predicated region
    $region14: #{tpu_custom_call.1} parent=1 // pred_check
      _
    $region15: #{tpu_custom_call.1} parent=1 // pred_check_branch
      %46 = sbr.rel (0) target = $region17
    $region16: #{tpu_custom_call.1} parent=1 // pred_region
      %47 = dma.done [#allocation8], 256
    $region17: #{tpu_custom_call.1} parent=1 // pred_fallthru
      _
    %s48 = sadd.s32 0, 0
    %s49 = smul.u32 2, %s48
    %s50 = sadd.s32 0, 0
    %s51 = smul.u32 2, %s50
    %p52 = scmp.eq.s32.totalorder 0, 0
    // Predicated region
    $region18: #{tpu_custom_call.1} parent=1 // pred_check
      %p53 = pneg %p52
    $region19: #{tpu_custom_call.1} parent=1 // pred_check_branch
      %55 = sbr.rel (%p53) target = $region21
    $region20: #{tpu_custom_call.1} parent=1 // pred_region
      %56 = vst [vmem:[#allocation2] sm:$0xff] 0.0
      %57 = vst [vmem:[#allocation2 + $0x8] sm:$0xff] 0.0
      %58 = vst [vmem:[#allocation3] sm:$0xff] 0.0
      %59 = vst [vmem:[#allocation3 + $0x8] sm:$0xff] 0.0
    $region21: #{tpu_custom_call.1} parent=1 // pred_fallthru
      _
    %v60 = vld [vmem:[#allocation4] sm:$0xff]
    %v61 = vld [vmem:[#allocation4 + $0x8] sm:$0xff]
    %v62 = vld [vmem:[#allocation7] sm:$0xff]
    %v63 = vld [vmem:[#allocation7 + $0x8] sm:$0xff]
    %v64 = vxor.u32 %v60, 2147483648
    %v65 = vxor.u32 %v61, 2147483648
    %v66 = vmul.f32 %v64, 1.442695
    %v67 = vpow.pop %v66
    %v68 = vmul.f32 %v65, 1.442695
    %v69 = vpow.pop %v68
    %v70 = vadd.f32 %v67, 1.0
    %v71 = vadd.f32 %v69, 1.0
    %v72 = vrcp.pop %v70
    %v73 = vmul.f32 1.0, %v72
    %v74 = vrcp.pop %v71
    %v75 = vmul.f32 1.0, %v74
    %v76 = vld [vmem:[#allocation2] sm:$0xff]
    %v77 = vld [vmem:[#allocation2 + $0x8] sm:$0xff]
    %v78 = vmul.f32 %v73, %v62
    %v79 = vmul.f32 %v75, %v63
    %v80 = vadd.f32 %v76, %v78
    %v81 = vadd.f32 %v77, %v79
    %82 = vst [vmem:[#allocation2] sm:$0xff] %v80
    %83 = vst [vmem:[#allocation2 + $0x8] sm:$0xff] %v81
    %v84 = vld [vmem:[#allocation3] sm:$0xff]
    %v85 = vld [vmem:[#allocation3 + $0x8] sm:$0xff]
    %v86 = vadd.f32 %v73, %v62
    %v87 = vadd.f32 %v75, %v63
    %v88 = vadd.f32 %v84, %v86
    %v89 = vadd.f32 %v85, %v87
    %90 = vst [vmem:[#allocation3] sm:$0xff] %v88
    %91 = vst [vmem:[#allocation3 + $0x8] sm:$0xff] %v89
    // Predicated region
    $region22: #{tpu_custom_call.1} parent=1 // pred_check
      %p92 = pneg %p52
    $region23: #{tpu_custom_call.1} parent=1 // pred_check_branch
      %94 = sbr.rel (%p92) target = $region25
    $region24: #{tpu_custom_call.1} parent=1 // pred_region
      %v95 = vld [vmem:[#allocation2] sm:$0xff]
      %v96 = vld [vmem:[#allocation2 + $0x8] sm:$0xff]
      %v97 = vadd.f32 %v95, %v96
      %v98 = vrot.slane %v97, 4
      %v99 = vadd.f32 %v97, %v98
      %v100 = vrot.slane %v99, 2
      %v101 = vadd.f32 %v99, %v100
      %v102 = vrot.slane %v101, 1
      %v103 = vadd.f32 %v101, %v102
      %104 = vst [vmem:[#allocation9] sm:$0x1] %v103
      %v105 = vld [vmem:[#allocation3] sm:$0xff]
      %v106 = vld [vmem:[#allocation3 + $0x8] sm:$0xff]
      %v107 = vadd.f32 %v105, %v106
      %v108 = vrot.slane %v107, 4
      %v109 = vadd.f32 %v107, %v108
      %v110 = vrot.slane %v109, 2
      %v111 = vadd.f32 %v109, %v110
      %v112 = vrot.slane %v111, 1
      %v113 = vadd.f32 %v111, %v112
      %114 = vst [vmem:[#allocation9 + $0x1] sm:$0x1] %v113
    $region25: #{tpu_custom_call.1} parent=1 // pred_fallthru
      _
    // Predicated region
    $region26: #{tpu_custom_call.1} parent=1 // pred_check
      _
    $region27: #{tpu_custom_call.1} parent=1 // pred_check_branch
      %116 = sbr.rel (0) target = $region29
    $region28: #{tpu_custom_call.1} parent=1 // pred_region
      %s118 = ssub.s32 32, 32
      %119 = vsyncadd [#allocation6], %s118
      %s121 = sshll.u32 [#allocation9], 4
      %s122 = int_to_ptr.vmem [resolvable:$true] %s121
      %124 = dma.vmem_to_hbm [thread:$0]  %s122, 32, %s2, [#allocation6]
    $region29: #{tpu_custom_call.1} parent=1 // pred_fallthru
      _
    // Predicated region
    $region30: #{tpu_custom_call.1} parent=1 // pred_check
      _
    $region31: #{tpu_custom_call.1} parent=1 // pred_check_branch
      %126 = sbr.rel (0) target = $region33
    $region32: #{tpu_custom_call.1} parent=1 // pred_region
      %127 = dma.done [#allocation6], 32
    $region33: #{tpu_custom_call.1} parent=1 // pred_fallthru
      _
    %128 = vsyncpa [#allocation5], 1
    %129 = vsyncpa [#allocation8], 1
    %130 = vsyncpa [#allocation6], 1

</llo_original>
